<compile_context>
chip_gen: v7x
topology: tpu7x:2x2x1
jax: 0.10.0
libtpu: 0.0.40
codegen_flags: <defaults>
</compile_context>

<pallas_src>
import functools

import jax
import jax.numpy as jnp
from jax.experimental import pallas as pl
from jax.experimental.pallas import tpu as pltpu

_EPS = 1e-5
_RESIDENT_MAX_BYTES = 4 << 20  # f32 footprint threshold for the single-read path


# --------------------------------------------------------------------------- #
# Tiling helpers
# --------------------------------------------------------------------------- #
def _block_budget_bytes():
    # ~2 MiB blocks already reach >=85% of the measured HBM roofline (lane
    # extent >> 512) and keep pass 2's working set (in + out, each double
    # buffered = 4 blocks) inside v5e's 16 MiB default scoped VMEM.  On v7x
    # (~2.3x HBM bandwidth) bigger blocks amortize the ~0.35us fixed per-step
    # cost better and 4 x 4 MiB still fits its 32 MiB scoped default.
    budget = 2 << 20
    try:
        ver = str(getattr(pltpu.get_tpu_info(), "chip_version", ""))
        if "7" in ver:
            budget = 4 << 20
    except Exception:
        pass
    return budget


def _pick_row_block(r):
    # Full sublane packing: tile the (N*C) row axis in multiples of 8 so small
    # channel counts still fill every vreg sublane.  If N*C is not a multiple
    # of 8 a block equal to the full row extent is always legal.
    # (Corner case: a huge, non-multiple-of-8 N*C would make the full-row block
    #  large; acceptable because the lane tile is then shrunk by the budget.)
    return 8 if r % 8 == 0 else r


def _pick_hw_tile(hw, rows, itemsize, budget_bytes):
    """Pick (tile, hwp): lane tile (multiple of 128) and padded extent hwp=k*tile.

    Prefers the largest tile within the per-block VMEM budget while keeping the
    zero-padding waste small (<= ~6%)."""
    max_tile = max(128, (budget_bytes // (itemsize * max(rows, 1))) // 128 * 128)
    hw128 = ((hw + 127) // 128) * 128
    if hw128 <= max_tile:
        return hw128, hw128  # one tile spans the whole (padded) row
    best_t, best_pad = 128, hw128 - hw
    t = max_tile
    while t >= 128:
        hwp = ((hw + t - 1) // t) * t
        pad = hwp - hw
        if pad * 16 <= hw:  # <= 6.25% waste: take the biggest acceptable tile
            return t, hwp
        if pad < best_pad:
            best_t, best_pad = t, pad
        t -= 128
    return best_t, ((hw + best_t - 1) // best_t) * best_t


# --------------------------------------------------------------------------- #
# Kernels
# --------------------------------------------------------------------------- #
def _fused_resident_kernel(alpha_ref, gamma_ref, beta_ref, x_ref, o_ref, *,
                           count, eps):
    # Single-read path: x_ref/o_ref (N, C, HWp); gamma/beta (1, C, 1); alpha SMEM (1,).
    x = x_ref[...].astype(jnp.float32)
    # Pad columns are zeros -> they contribute nothing to sum / sum-of-squares;
    # divide by the true element count.
    s = jnp.sum(jnp.sum(x, axis=2, keepdims=True), axis=0, keepdims=True)   # (1,C,1)
    q = jnp.sum(jnp.sum(x * x, axis=2, keepdims=True), axis=0, keepdims=True)
    inv_cnt = 1.0 / count
    mean = s * inv_cnt
    var = jnp.maximum(q * inv_cnt - mean * mean, 0.0)        # biased variance
    inv_std = jax.lax.rsqrt(var + eps)
    scale = gamma_ref[...] * inv_std
    shift = beta_ref[...] - mean * scale
    y = x * scale + shift
    a = alpha_ref[0]
    o_ref[...] = jnp.where(y > 0.0, y, a * y).astype(o_ref.dtype)


def _stats_kernel(x_ref, sum_ref, sumsq_ref):
    # x_ref: (rb, tile).  sum_ref / sumsq_ref: (rb, 1) f32 accumulators, resident
    # in VMEM across the HW ("arbitrary") grid axis for each row block.
    @pl.when(pl.program_id(1) == 0)
    def _():
        sum_ref[...] = jnp.zeros_like(sum_ref)
        sumsq_ref[...] = jnp.zeros_like(sumsq_ref)

    x = x_ref[...].astype(jnp.float32)
    sum_ref[...] += jnp.sum(x, axis=-1, keepdims=True)
    sumsq_ref[...] += jnp.sum(x * x, axis=-1, keepdims=True)


def _normalize_kernel(alpha_ref, scale_ref, shift_ref, x_ref, o_ref):
    # x_ref/o_ref: (rb, tile); scale_ref/shift_ref: (rb, 1); alpha_ref: SMEM (1,)
    x = x_ref[...].astype(jnp.float32)
    y = x * scale_ref[...] + shift_ref[...]                  # one FMA per element
    a = alpha_ref[0]
    o_ref[...] = jnp.where(y > 0.0, y, a * y).astype(o_ref.dtype)


# --------------------------------------------------------------------------- #
# Wrapper
# --------------------------------------------------------------------------- #
def norm_prelu(x_nchw, gamma, beta, alpha, *, eps=_EPS, force_streamed=False):
    """x_nchw: (N, C, H, W). gamma/beta: (C,). alpha: scalar PReLU slope."""
    n, c, h, w = x_nchw.shape
    hw = h * w
    r = n * c

    gamma_f = gamma.astype(jnp.float32).reshape(c)
    beta_f = beta.astype(jnp.float32).reshape(c)
    alpha1d = jnp.asarray(alpha, jnp.float32).reshape(1)

    hw128 = ((hw + 127) // 128) * 128
    resident_ok = (not force_streamed) and (r * hw128 * 4 <= _RESIDENT_MAX_BYTES)

    if resident_ok:
        # ---- single-read fused path (stats + normalize + PReLU in one call) --
        hwp = hw128
        x3d = x_nchw.reshape(n, c, hw)
        if hwp != hw:
            x3d = jnp.pad(x3d, ((0, 0), (0, 0), (0, hwp - hw)))
        out3d = pl.pallas_call(
            functools.partial(_fused_resident_kernel,
                              count=float(n * hw), eps=float(eps)),
            out_shape=jax.ShapeDtypeStruct((n, c, hwp), x3d.dtype),
            grid=(1,),
            in_specs=[
                pl.BlockSpec(memory_space=pltpu.SMEM),                 # alpha
                pl.BlockSpec((1, c, 1), lambda i: (0, 0, 0)),          # gamma
                pl.BlockSpec((1, c, 1), lambda i: (0, 0, 0)),          # beta
                pl.BlockSpec((n, c, hwp), lambda i: (0, 0, 0)),        # x
            ],
            out_specs=pl.BlockSpec((n, c, hwp), lambda i: (0, 0, 0)),
            compiler_params=pltpu.CompilerParams(
                dimension_semantics=("arbitrary",),
                vmem_limit_bytes=32 << 20),
        )(alpha1d, gamma_f.reshape(1, c, 1), beta_f.reshape(1, c, 1), x3d)
        return out3d[..., :hw].reshape(n, c, h, w)

    # ---- streamed path: two auto-pipelined passes over (N*C, HWp) -----------
    rb = _pick_row_block(r)
    tile, hwp = _pick_hw_tile(hw, rb, x_nchw.dtype.itemsize, _block_budget_bytes())
    x3d = x_nchw.reshape(n, c, hw)
    if hwp != hw:
        x3d = jnp.pad(x3d, ((0, 0), (0, 0), (0, hwp - hw)))
    x2d = x3d.reshape(r, hwp)                     # free reshape, row = n*C + c
    grid = (r // rb, hwp // tile)

    # pass 1: per-row sum / sum-of-squares partials (row-block axis is parallel
    # => each TensorCore owns disjoint accumulators; HW axis is the reduction).
    sums, sqs = pl.pallas_call(
        _stats_kernel,
        out_shape=(jax.ShapeDtypeStruct((r, 1), jnp.float32),
                   jax.ShapeDtypeStruct((r, 1), jnp.float32)),
        grid=grid,
        in_specs=[pl.BlockSpec((rb, tile), lambda i, j: (i, j))],
        out_specs=(pl.BlockSpec((rb, 1), lambda i, j: (i, 0)),
                   pl.BlockSpec((rb, 1), lambda i, j: (i, 0))),
        compiler_params=pltpu.CompilerParams(
            dimension_semantics=("parallel", "arbitrary")),
    )(x2d)

    # tiny (N,C) epilogue: combine per-row partials Welford/Chan-style into
    # per-channel mean / biased variance (better conditioned than one global
    # E[x^2] - mean^2), then fold gamma/beta into per-row scale & shift.
    sum_nc = sums.reshape(n, c)
    sq_nc = sqs.reshape(n, c)
    cnt_row = jnp.float32(hw)
    cnt_all = jnp.float32(n * hw)
    mean_row = sum_nc / cnt_row
    m2_row = jnp.maximum(sq_nc - cnt_row * mean_row * mean_row, 0.0)
    mean_c = jnp.sum(sum_nc, axis=0) / cnt_all
    m2_c = jnp.sum(m2_row, axis=0) + cnt_row * jnp.sum(
        (mean_row - mean_c[None, :]) ** 2, axis=0)
    var_c = m2_c / cnt_all                                    # biased variance
    inv_std = jax.lax.rsqrt(var_c + eps)
    scale_c = gamma_f * inv_std
    shift_c = beta_f - mean_c * scale_c
    scale_rows = jnp.tile(scale_c, (n,)).reshape(r, 1)
    shift_rows = jnp.tile(shift_c, (n,)).reshape(r, 1)

    # pass 2: normalize + PReLU, fully parallel grid (megacore sharding).
    out2d = pl.pallas_call(
        _normalize_kernel,
        out_shape=jax.ShapeDtypeStruct((r, hwp), x2d.dtype),
        grid=grid,
        in_specs=[
            pl.BlockSpec(memory_space=pltpu.SMEM),            # alpha (scalar)
            pl.BlockSpec((rb, 1), lambda i, j: (i, 0)),       # scale per row
            pl.BlockSpec((rb, 1), lambda i, j: (i, 0)),       # shift per row
            pl.BlockSpec((rb, tile), lambda i, j: (i, j)),    # x tile
        ],
        out_specs=pl.BlockSpec((rb, tile), lambda i, j: (i, j)),
        compiler_params=pltpu.CompilerParams(
            dimension_semantics=("parallel", "parallel")),
    )(alpha1d, scale_rows, shift_rows, x2d)

    return out2d.reshape(n, c, hwp)[..., :hw].reshape(n, c, h, w)


# --------------------------------------------------------------------------- #
# Reference + self-check
# --------------------------------------------------------------------------- #
def _reference(x_nchw, gamma, beta, alpha, eps=_EPS):
    mean = jnp.mean(x_nchw, axis=(0, 2, 3), keepdims=True)
    var = jnp.mean((x_nchw - mean) ** 2, axis=(0, 2, 3), keepdims=True)
    y = (x_nchw - mean) / jnp.sqrt(var + eps)
    y = y * gamma.reshape(1, -1, 1, 1) + beta.reshape(1, -1, 1, 1)
    return jnp.where(y > 0, y, alpha * y)


if __name__ == "__main__":
    key = jax.random.PRNGKey(0)
    N, C, H, W = 2, 4, 16, 16
    x = jax.random.normal(key, (N, C, H, W), dtype=jnp.float32)

    # Parameter init matching nn.BatchNorm2d / nn.PReLU defaults.
    gamma = jnp.ones((C,), jnp.float32)    # BatchNorm2d weight
    beta = jnp.zeros((C,), jnp.float32)    # BatchNorm2d bias
    alpha = jnp.float32(0.25)              # PReLU default slope

    # Small shape -> exercises the single-read fused (resident) path.
    out = jax.block_until_ready(norm_prelu(x, gamma, beta, alpha))
    ref = _reference(x, gamma, beta, alpha)
    assert out.shape == (N, C, H, W)
    assert jnp.allclose(out, ref, atol=1e-4, rtol=1e-5), float(
        jnp.max(jnp.abs(out - ref)))

    # Also exercise the streamed two-pass path, including non-multiple-of-128
    # spatial padding and non-trivial affine params.
    k1, k2, k3 = jax.random.split(jax.random.PRNGKey(1), 3)
    x2 = jax.random.normal(k1, (2, 4, 20, 20), jnp.float32)
    gamma2 = 0.5 + jax.random.uniform(k2, (4,), jnp.float32)
    beta2 = jax.random.normal(k3, (4,), jnp.float32) * 0.1
    out2 = jax.block_until_ready(
        norm_prelu(x2, gamma2, beta2, alpha, force_streamed=True))
    ref2 = _reference(x2, gamma2, beta2, alpha)
    assert jnp.allclose(out2, ref2, atol=1e-4, rtol=1e-5), float(
        jnp.max(jnp.abs(out2 - ref2)))

    print("KERNEL_OK")
</pallas_src>

<mosaic_0001>
module attributes {stable_mosaic.version = 11 : i64} {
  func.func @_fused_resident_kernel(%arg0: i32, %arg1: memref<1xf32, #tpu.memory_space<smem>>, %arg2: memref<1x4x1xf32, #tpu.memory_space<vmem>>, %arg3: memref<1x4x1xf32, #tpu.memory_space<vmem>>, %arg4: memref<2x4x256xf32, #tpu.memory_space<vmem>>, %arg5: memref<2x4x256xf32, #tpu.memory_space<vmem>>) attributes {dimension_semantics = [#tpu.dimension_semantics<arbitrary>], iteration_bounds = array<i64: 1>, scalar_prefetch = 0 : i64, scratch_operands = 0 : i64, tpu.core_type = #tpu.core_type<tc>, window_params = [{transform_indices = @transform_0, window_bounds = array<i64: 1>}, {pipeline_mode = #tpu.pipeline_mode<synchronous>, transform_indices = @transform_1, window_bounds = array<i64: 1, 4, 1>}, {pipeline_mode = #tpu.pipeline_mode<synchronous>, transform_indices = @transform_2, window_bounds = array<i64: 1, 4, 1>}, {pipeline_mode = #tpu.pipeline_mode<synchronous>, transform_indices = @transform_3, window_bounds = array<i64: 2, 4, 256>}, {pipeline_mode = #tpu.pipeline_mode<synchronous>, transform_indices = @transform_4, window_bounds = array<i64: 2, 4, 256>}]} {
    %c0 = arith.constant 0 : index
    %c0_0 = arith.constant 0 : index
    %c0_1 = arith.constant 0 : index
    %0 = vector.load %arg4[%c0, %c0_0, %c0_1] : memref<2x4x256xf32, #tpu.memory_space<vmem>>, vector<2x4x256xf32>
    %cst = arith.constant dense<0.000000e+00> : vector<2x4xf32>
    %1 = vector.multi_reduction <add>, %0, %cst [2] : vector<2x4x256xf32> to vector<2x4xf32>
    %2 = vector.shape_cast %1 : vector<2x4xf32> to vector<2x4x1xf32>
    %cst_2 = arith.constant dense<0.000000e+00> : vector<4x1xf32>
    %3 = vector.multi_reduction <add>, %2, %cst_2 [0] : vector<2x4x1xf32> to vector<4x1xf32>
    %4 = vector.shape_cast %3 : vector<4x1xf32> to vector<1x4x1xf32>
    %5 = arith.mulf %0, %0 : vector<2x4x256xf32>
    %cst_3 = arith.constant dense<0.000000e+00> : vector<2x4xf32>
    %6 = vector.multi_reduction <add>, %5, %cst_3 [2] : vector<2x4x256xf32> to vector<2x4xf32>
    %7 = vector.shape_cast %6 : vector<2x4xf32> to vector<2x4x1xf32>
    %cst_4 = arith.constant dense<0.000000e+00> : vector<4x1xf32>
    %8 = vector.multi_reduction <add>, %7, %cst_4 [0] : vector<2x4x1xf32> to vector<4x1xf32>
    %9 = vector.shape_cast %8 : vector<4x1xf32> to vector<1x4x1xf32>
    %cst_5 = arith.constant 0.001953125 : f32
    %10 = vector.broadcast %cst_5 : f32 to vector<1x4x1xf32>
    %11 = arith.mulf %4, %10 : vector<1x4x1xf32>
    %cst_6 = arith.constant 0.001953125 : f32
    %12 = vector.broadcast %cst_6 : f32 to vector<1x4x1xf32>
    %13 = arith.mulf %9, %12 : vector<1x4x1xf32>
    %14 = arith.mulf %11, %11 : vector<1x4x1xf32>
    %15 = arith.subf %13, %14 : vector<1x4x1xf32>
    %cst_7 = arith.constant 0.000000e+00 : f32
    %16 = vector.broadcast %cst_7 : f32 to vector<1x4x1xf32>
    %17 = arith.maximumf %15, %16 : vector<1x4x1xf32>
    %cst_8 = arith.constant 9.99999974E-6 : f32
    %18 = vector.broadcast %cst_8 : f32 to vector<1x4x1xf32>
    %19 = arith.addf %17, %18 : vector<1x4x1xf32>
    %20 = math.rsqrt %19 : vector<1x4x1xf32>
    %c0_9 = arith.constant 0 : index
    %c0_10 = arith.constant 0 : index
    %c0_11 = arith.constant 0 : index
    %21 = vector.load %arg2[%c0_9, %c0_10, %c0_11] : memref<1x4x1xf32, #tpu.memory_space<vmem>>, vector<1x4x1xf32>
    %22 = arith.mulf %21, %20 : vector<1x4x1xf32>
    %c0_12 = arith.constant 0 : index
    %c0_13 = arith.constant 0 : index
    %c0_14 = arith.constant 0 : index
    %23 = vector.load %arg3[%c0_12, %c0_13, %c0_14] : memref<1x4x1xf32, #tpu.memory_space<vmem>>, vector<1x4x1xf32>
    %24 = arith.mulf %11, %22 : vector<1x4x1xf32>
    %25 = arith.subf %23, %24 : vector<1x4x1xf32>
    %26 = vector.broadcast %22 : vector<1x4x1xf32> to vector<2x4x256xf32>
    %27 = arith.mulf %0, %26 : vector<2x4x256xf32>
    %28 = vector.broadcast %25 : vector<1x4x1xf32> to vector<2x4x256xf32>
    %29 = arith.addf %27, %28 : vector<2x4x256xf32>
    %c0_15 = arith.constant 0 : index
    %30 = memref.load %arg1[%c0_15] : memref<1xf32, #tpu.memory_space<smem>>
    %cst_16 = arith.constant 0.000000e+00 : f32
    %31 = vector.broadcast %cst_16 : f32 to vector<2x4x256xf32>
    %32 = arith.cmpf ogt, %29, %31 : vector<2x4x256xf32>
    %33 = vector.broadcast %30 : f32 to vector<2x4x256xf32>
    %34 = arith.mulf %33, %29 : vector<2x4x256xf32>
    %35 = arith.select %32, %29, %34 : vector<2x4x256xi1>, vector<2x4x256xf32>
    %c0_17 = arith.constant 0 : index
    %c0_18 = arith.constant 0 : index
    %c0_19 = arith.constant 0 : index
    %36 = vector.load %arg5[%c0_17, %c0_18, %c0_19] : memref<2x4x256xf32, #tpu.memory_space<vmem>>, vector<2x4x256xf32>
    tpu.vector_store %arg5[%c0_17, %c0_18, %c0_19], %35 {strides = array<i32>} : memref<2x4x256xf32, #tpu.memory_space<vmem>>, vector<2x4x256xf32>,
    return
  }
  func.func @transform_0(%arg0: i32) -> i32 {
    %c0_i32 = arith.constant 0 : i32
    %c0_i32_0 = arith.constant 0 : i32
    return %c0_i32 : i32
  }
  func.func @transform_1(%arg0: i32) -> (i32, i32, i32) {
    %c0_i32 = arith.constant 0 : i32
    %c0_i32_0 = arith.constant 0 : i32
    %c0_i32_1 = arith.constant 0 : i32
    %c0_i32_2 = arith.constant 0 : i32
    return %c0_i32, %c0_i32_0, %c0_i32_1 : i32, i32, i32
  }
  func.func @transform_2(%arg0: i32) -> (i32, i32, i32) {
    %c0_i32 = arith.constant 0 : i32
    %c0_i32_0 = arith.constant 0 : i32
    %c0_i32_1 = arith.constant 0 : i32
    %c0_i32_2 = arith.constant 0 : i32
    return %c0_i32, %c0_i32_0, %c0_i32_1 : i32, i32, i32
  }
  func.func @transform_3(%arg0: i32) -> (i32, i32, i32) {
    %c0_i32 = arith.constant 0 : i32
    %c0_i32_0 = arith.constant 0 : i32
    %c0_i32_1 = arith.constant 0 : i32
    %c0_i32_2 = arith.constant 0 : i32
    return %c0_i32, %c0_i32_0, %c0_i32_1 : i32, i32, i32
  }
  func.func @transform_4(%arg0: i32) -> (i32, i32, i32) {
    %c0_i32 = arith.constant 0 : i32
    %c0_i32_0 = arith.constant 0 : i32
    %c0_i32_1 = arith.constant 0 : i32
    %c0_i32_2 = arith.constant 0 : i32
    return %c0_i32, %c0_i32_0, %c0_i32_1 : i32, i32, i32
  }
}

</mosaic_0001>

<llo_original>
// kernel: tpu_custom_call.1
$region0: #{tpu_custom_call.1}
  #allocation0 [shape = 'u32[]', space=smem, size = 0x4, offset = 0x4, fixed_abs, tag = 'smem constant byte address 0x4 - core index']
  #allocation1 [shape = 'u32[144,128]{1,0:T(1,128)}', space=vmem, size = 0x12000, scoped, tag = 'internal scratch']
  #allocation2 [shape = 'f32[1]{0:T(128)S(6)}', space=smem, size = 0x200, scoped, tag = 'scoped memory for tpu_custom_call.1']
  %s0 = inlined_call_operand.<no memory space> [shape: f32[1], index: 0, kind: input, shape index: {}]
  %s1 = inlined_call_operand.vmem [shape: f32[1,4,1], index: 1, kind: input, shape index: {}]
  %s2 = inlined_call_operand.vmem [shape: f32[1,4,1], index: 2, kind: input, shape index: {}]
  %s3 = inlined_call_operand.vmem [shape: f32[2,4,256], index: 3, kind: input, shape index: {}]
  %s4 = inlined_call_operand.hbm [shape: f32[2,4,256], index: 4, kind: output, shape index: {}]
  %s5 = sld [smem:[#allocation0]]
  $region26: #{tpu_custom_call.1} parent=0
    _
  %s7 = ssub.s32 1, %s5
  %s8 = scalar_select 0, %s7, %s5
  %9 = sst [smem:[#allocation2]] %s0
  $region1: #{tpu_custom_call.1} parent=0
    #allocation3 [shape = 'u8[8192]{0}', space=vmem, size = 0x2000, scoped, tag = 'output window, operand 0, single buffered']
    #allocation4 [shape = 's32[1]{0}', space=sflag, size = 0x4, scoped, tag = 'scoped memory for tpu_custom_call.1']
    %10 = vsyncpa [#allocation4], 0
    // Predicated region
    $region2: #{tpu_custom_call.1} parent=1 // pred_check
      _
    $region3: #{tpu_custom_call.1} parent=1 // pred_check_branch
      %12 = sbr.rel (0) target = $region5
    $region4: #{tpu_custom_call.1} parent=1 // pred_region
      _
    $region5: #{tpu_custom_call.1} parent=1 // pred_fallthru
      _
    // Predicated region
    $region6: #{tpu_custom_call.1} parent=1 // pred_check
      _
    $region7: #{tpu_custom_call.1} parent=1 // pred_check_branch
      %14 = sbr.rel (0) target = $region9
    $region8: #{tpu_custom_call.1} parent=1 // pred_region
      _
    $region9: #{tpu_custom_call.1} parent=1 // pred_fallthru
      _
    // Predicated region
    $region10: #{tpu_custom_call.1} parent=1 // pred_check
      _
    $region11: #{tpu_custom_call.1} parent=1 // pred_check_branch
      %16 = sbr.rel (0) target = $region13
    $region12: #{tpu_custom_call.1} parent=1 // pred_region
      _
    $region13: #{tpu_custom_call.1} parent=1 // pred_fallthru
      _
    // Predicated region
    $region14: #{tpu_custom_call.1} parent=1 // pred_check
      _
    $region15: #{tpu_custom_call.1} parent=1 // pred_check_branch
      %18 = sbr.rel (0) target = $region17
    $region16: #{tpu_custom_call.1} parent=1 // pred_region
      _
    $region17: #{tpu_custom_call.1} parent=1 // pred_fallthru
      _
    %v19 = vld [vmem:[%s3] sm:$0xff]
    %v20 = vld [vmem:[%s3 + $0x8] sm:$0xff]
    %v23 = vcombine.high %v19, %v19
    %v24 = vcombine.high %v20, %v20
    %vm27 = vcmask 1043456
    %v28 = vsel %vm27, %v19, 0.0
    %v29 = vsel %vm27, %v23, 0.0
    %v30 = vadd.f32 %v28, %v29
    %31 = vadd.xlane.f32.xlu0 %v30
    %v32 = vpop.xlane.xlu0 %31
    %v33 = vsel %vm27, %v20, 0.0
    %v34 = vsel %vm27, %v24, 0.0
    %v35 = vadd.f32 %v33, %v34
    %36 = vadd.xlane.f32.xlu0 %v35
    %v37 = vpop.xlane.xlu0 %36
    %v38 = vsel %vm27, %v32, 0.0
    %v39 = vsel %vm27, %v37, 0.0
    %v40 = vadd.f32 %v38, %v39
    %v41 = vmul.f32 %v19, %v19
    %v42 = vmul.f32 %v20, %v20
    %v45 = vcombine.high %v41, %v41
    %v46 = vcombine.high %v42, %v42
    %v49 = vsel %vm27, %v41, 0.0
    %v50 = vsel %vm27, %v45, 0.0
    %v51 = vadd.f32 %v49, %v50
    %52 = vadd.xlane.f32.xlu0 %v51
    %v53 = vpop.xlane.xlu0 %52
    %v54 = vsel %vm27, %v42, 0.0
    %v55 = vsel %vm27, %v46, 0.0
    %v56 = vadd.f32 %v54, %v55
    %57 = vadd.xlane.f32.xlu0 %v56
    %v58 = vpop.xlane.xlu0 %57
    %v59 = vsel %vm27, %v53, 0.0
    %v60 = vsel %vm27, %v58, 0.0
    %v61 = vadd.f32 %v59, %v60
    %v62 = vmul.f32 %v40, 0.001953125
    %v63 = vmul.f32 %v61, 0.001953125
    %v64 = vmul.f32 %v62, %v62
    %v65 = vsub.f32 %v63, %v64
    %v66 = vmax.f32 %v65, 0.0
    %v67 = vadd.f32 %v66, 1e-05
    %v68 = vrsqrt.pop %v67
    %v69 = vld [vmem:[%s1] sm:$0xf]
    %v70 = vmul.f32 %v69, %v68
    %v71 = vld [vmem:[%s2] sm:$0xf]
    %v72 = vmul.f32 %v62, %v70
    %v73 = vsub.f32 %v71, %v72
    %75 = vset.pattern.permute.xlu0 0
    %76 = vperm.xlu0 %75, %v70
    %v77 = vpop.permute.xlu0 %76
    %v79 = vunpack.c.l.s4 839922192
    %v80 = vunpack.c.0.s8 %v79
    %v81 = vlaneseq
    %v82 = vshrl.u32 %v81, 7
    %v83 = vsub.s32 %v80, %v82
    %v84 = vrot.slane %v77, %v83
    %v86 = vmul.f32 %v19, %v84
    %v87 = vmul.f32 %v20, %v84
    %89 = vset.pattern.permute.xlu0 0
    %90 = vperm.xlu0 %89, %v73
    %v91 = vpop.permute.xlu0 %90
    %v93 = vunpack.c.l.s4 839922192
    %v94 = vunpack.c.0.s8 %v93
    %v95 = vlaneseq
    %v96 = vshrl.u32 %v95, 7
    %v97 = vsub.s32 %v94, %v96
    %v98 = vrot.slane %v91, %v97
    %v100 = vadd.f32 %v86, %v98
    %v101 = vadd.f32 %v87, %v98
    %s102 = sld [smem:[#allocation2]]
    %vm103 = vcmp.gt.f32.partialorder %v100, 0.0
    %vm104 = vcmp.gt.f32.partialorder %v101, 0.0
    %v105 = vstv %s102
    %v106 = vmul.f32 %v105, %v100
    %v107 = vmul.f32 %v105, %v101
    %v108 = vsel %vm103, %v100, %v106
    %v109 = vsel %vm104, %v101, %v107
    %110 = vst [vmem:[#allocation3] sm:$0xff] %v108
    %111 = vst [vmem:[#allocation3 + $0x8] sm:$0xff] %v109
    // Predicated region
    $region18: #{tpu_custom_call.1} parent=1 // pred_check
      _
    $region19: #{tpu_custom_call.1} parent=1 // pred_check_branch
      %113 = sbr.rel (0) target = $region21
    $region20: #{tpu_custom_call.1} parent=1 // pred_region
      %s115 = ssub.s32 256, 256
      %116 = vsyncadd [#allocation4], %s115
      %s117 = sshll.u32 [#allocation3], 4
      %s118 = int_to_ptr.vmem [resolvable:$true] %s117
      %123 = dma.vmem_to_hbm [thread:$0]  %s118, 256, %s4, [#allocation4], 128, 128, 8
    $region21: #{tpu_custom_call.1} parent=1 // pred_fallthru
      _
    // Predicated region
    $region22: #{tpu_custom_call.1} parent=1 // pred_check
      _
    $region23: #{tpu_custom_call.1} parent=1 // pred_check_branch
      %125 = sbr.rel (0) target = $region25
    $region24: #{tpu_custom_call.1} parent=1 // pred_region
      %126 = dma.done [#allocation4], 256
    $region25: #{tpu_custom_call.1} parent=1 // pred_fallthru
      _
    %127 = vsyncpa [#allocation4], 1

</llo_original>
